<compile_context>
chip_gen: v7x
topology: tpu7x:2x2x1
jax: 0.10.0
libtpu: 0.0.40
codegen_flags: <defaults>
</compile_context>

<pallas_src>
import functools

import jax
import jax.numpy as jnp
from jax.experimental import pallas as pl
from jax.experimental.pallas import tpu as pltpu

_LANE_CANDIDATES = (512, 256, 128)   # lane-dense widths (multiples of 128)
_MAX_BLOCK_BYTES = 2 << 20           # 2 MiB per f32 buffer (<= 8 MiB double-buffered in+out)


def _round_up(a, b):
    return ((a + b - 1) // b) * b


def _msample_kernel(x_ref, o_ref, *, inv_delt, delt):
    x = x_ref[...].astype(jnp.float32)
    # f32 -> int32 convert truncates toward zero (matches torch's truncating cast
    # for in-range values). Multiply by 2**m instead of dividing by 2**-m (exact).
    m_i32 = (x * inv_delt).astype(jnp.int32)
    # Emulate int16 modular wrap while staying in 32-bit vregs (no i16 relayout).
    # Relies on arithmetic right-shift for signed int32 (JAX-guaranteed).
    m_wrapped = jnp.right_shift(jnp.left_shift(m_i32, 16), 16)
    o_ref[...] = (m_wrapped.astype(jnp.float32) * delt).astype(o_ref.dtype)


def msample(x, N=16, m=6):
    """Pallas implementation of mSample.forward. Works for any input shape."""
    del N  # N (and Q) are unused in the PyTorch forward path.
    delt = float(2.0 ** (-m))
    inv_delt = float(2.0 ** m)

    orig_shape = x.shape
    total = int(x.size)
    if total == 0:
        return jnp.zeros(orig_shape, jnp.float32)

    # Fast path: pick the widest lane width that divides the element count ->
    # a plain (free) reshape, no pad, no output slice.
    lane = None
    for cand in _LANE_CANDIDATES:
        if total % cand == 0:
            lane = cand
            break

    flat = x.reshape(-1)
    padded_total = total
    if lane is None:
        # Ragged element count (not a multiple of 128) — rare for NN activation
        # maps.  Pad by < 128 elements; this costs one extra pad + slice pass.
        lane = 128
        padded_total = _round_up(total, lane)
        flat = jnp.pad(flat, (0, padded_total - total))

    rows = padded_total // lane

    # Block rows: multiple of 8, at most ~2 MiB/buffer, and capped near rows/2
    # so the "parallel" grid has >= 2 steps (v7x megacore) whenever rows > 8.
    if rows <= 8:
        block_r = rows            # block == full array dims (always legal)
    else:
        max_block_r = max(8, _MAX_BLOCK_BYTES // (lane * 4))
        block_r = max(8, min(max_block_r, _round_up(pl.cdiv(rows, 2), 8)))
    grid = (pl.cdiv(rows, block_r),)   # partial last block handled by masking

    x2d = flat.reshape(rows, lane)
    kernel = functools.partial(_msample_kernel, inv_delt=inv_delt, delt=delt)

    out2d = pl.pallas_call(
        kernel,
        out_shape=jax.ShapeDtypeStruct((rows, lane), jnp.float32),
        grid_spec=pltpu.PrefetchScalarGridSpec(
            num_scalar_prefetch=0,
            grid=grid,
            in_specs=[pl.BlockSpec((block_r, lane), lambda i: (i, 0))],
            out_specs=pl.BlockSpec((block_r, lane), lambda i: (i, 0)),
        ),
        compiler_params=pltpu.CompilerParams(
            dimension_semantics=("parallel",),
        ),
    )(x2d)  # pass native dtype; cast to f32 happens in-kernel

    out_flat = out2d.reshape(-1)
    if padded_total != total:
        out_flat = out_flat[:total]
    return out_flat.reshape(orig_shape)


if __name__ == "__main__":
    key = jax.random.PRNGKey(0)
    delt = 2.0 ** (-6)

    def ref_fn(x):
        # Reference in plain JAX (same math as the PyTorch forward).
        return delt * (
            jnp.trunc(x.astype(jnp.float32) / delt)
            .astype(jnp.int32)
            .astype(jnp.int16)
            .astype(jnp.float32)
        )

    shapes = [
        (2, 4, 16, 16),    # small conv activation: fast path, single block
        (4, 16, 32, 32),   # fast path, multi-step ("parallel") grid
        (3, 5, 7, 7),      # ragged element count: padded fallback path
    ]
    keys = jax.random.split(key, len(shapes))
    for k, shp in zip(keys, shapes):
        x = jax.random.normal(k, shp, dtype=jnp.float32) * 2.0
        out = jax.block_until_ready(msample(x, N=16, m=6))
        assert out.shape == x.shape and out.dtype == jnp.float32
        assert bool(jnp.allclose(out, ref_fn(x), atol=0.0)), f"mismatch at {shp}"

    print("KERNEL_OK")
</pallas_src>

<mosaic_0001>
module attributes {stable_mosaic.version = 11 : i64} {
  func.func @_msample_kernel(%arg0: i32, %arg1: memref<4x512xf32, #tpu.memory_space<vmem>>, %arg2: memref<4x512xf32, #tpu.memory_space<vmem>>) attributes {dimension_semantics = [#tpu.dimension_semantics<parallel>], iteration_bounds = array<i64: 1>, scalar_prefetch = 0 : i64, scratch_operands = 0 : i64, tpu.core_type = #tpu.core_type<tc>, window_params = [{transform_indices = @transform_0, window_bounds = array<i64: 4, 512>}, {transform_indices = @transform_1, window_bounds = array<i64: 4, 512>}]} {
    %c0 = arith.constant 0 : index
    %c0_0 = arith.constant 0 : index
    %0 = vector.load %arg1[%c0, %c0_0] : memref<4x512xf32, #tpu.memory_space<vmem>>, vector<4x512xf32>
    %cst = arith.constant 6.400000e+01 : f32
    %1 = vector.broadcast %cst : f32 to vector<4x512xf32>
    %2 = arith.mulf %0, %1 : vector<4x512xf32>
    %3 = arith.fptosi %2 : vector<4x512xf32> to vector<4x512xi32>
    %c16_i32 = arith.constant 16 : i32
    %4 = vector.broadcast %c16_i32 : i32 to vector<4x512xi32>
    %5 = arith.shli %3, %4 : vector<4x512xi32>
    %c16_i32_1 = arith.constant 16 : i32
    %6 = vector.broadcast %c16_i32_1 : i32 to vector<4x512xi32>
    %7 = arith.shrsi %5, %6 : vector<4x512xi32>
    %8 = arith.sitofp %7 : vector<4x512xi32> to vector<4x512xf32>
    %cst_2 = arith.constant 1.562500e-02 : f32
    %9 = vector.broadcast %cst_2 : f32 to vector<4x512xf32>
    %10 = arith.mulf %8, %9 : vector<4x512xf32>
    %c0_3 = arith.constant 0 : index
    %c0_4 = arith.constant 0 : index
    %11 = vector.load %arg2[%c0_3, %c0_4] : memref<4x512xf32, #tpu.memory_space<vmem>>, vector<4x512xf32>
    tpu.vector_store %arg2[%c0_3, %c0_4], %10 {strides = array<i32>} : memref<4x512xf32, #tpu.memory_space<vmem>>, vector<4x512xf32>,
    return
  }
  func.func @transform_0(%arg0: i32) -> (i32, i32) {
    %c0_i32 = arith.constant 0 : i32
    %c0_i32_0 = arith.constant 0 : i32
    return %arg0, %c0_i32 : i32, i32
  }
  func.func @transform_1(%arg0: i32) -> (i32, i32) {
    %c0_i32 = arith.constant 0 : i32
    %c0_i32_0 = arith.constant 0 : i32
    return %arg0, %c0_i32 : i32, i32
  }
}

</mosaic_0001>

<llo_original>
// kernel: tpu_custom_call.1
$region0: #{tpu_custom_call.1}
  #allocation0 [shape = 'u32[]', space=smem, size = 0x4, offset = 0x4, fixed_abs, tag = 'smem constant byte address 0x4 - core index']
  #allocation1 [shape = 'u32[144,128]{1,0:T(1,128)}', space=vmem, size = 0x12000, scoped, tag = 'internal scratch']
  %s0 = inlined_call_operand.hbm [shape: f32[4,512], index: 0, kind: input, shape index: {}]
  %s1 = inlined_call_operand.hbm [shape: f32[4,512], index: 1, kind: output, shape index: {}]
  %s2 = sld [smem:[#allocation0]]
  $region18: #{tpu_custom_call.1} parent=0
    _
  %s4 = ssub.s32 1, %s2
  %s5 = scalar_select 0, %s4, %s2
  $region1: #{tpu_custom_call.1} parent=0
    #allocation2 [shape = 'u8[8192]{0}', space=vmem, size = 0x2000, scoped, tag = 'input window, operand 0, single buffered']
    #allocation3 [shape = 's32[1]{0}', space=sflag, size = 0x4, scoped, tag = 'scoped memory for tpu_custom_call.1']
    #allocation4 [shape = 's32[1]{0}', space=sflag, size = 0x4, scoped, tag = 'scoped memory for tpu_custom_call.1']
    #allocation5 [shape = 'u8[8192]{0}', space=vmem, size = 0x2000, scoped, tag = 'output window, operand 0, single buffered']
    %6 = vsyncpa [#allocation3], 0
    %7 = vsyncpa [#allocation4], 0
    // Predicated region
    $region2: #{tpu_custom_call.1} parent=1 // pred_check
      _
    $region3: #{tpu_custom_call.1} parent=1 // pred_check_branch
      %9 = sbr.rel (0) target = $region5
    $region4: #{tpu_custom_call.1} parent=1 // pred_region
      %s11 = ssub.s32 256, 256
      %12 = vsyncadd [#allocation3], %s11
      %s14 = sshll.u32 [#allocation2], 4
      %s15 = int_to_ptr.vmem [resolvable:$true] %s14
      %17 = dma.hbm_to_vmem [thread:$0]  %s0, 256, %s15, [#allocation3]
    $region5: #{tpu_custom_call.1} parent=1 // pred_fallthru
      _
    // Predicated region
    $region6: #{tpu_custom_call.1} parent=1 // pred_check
      _
    $region7: #{tpu_custom_call.1} parent=1 // pred_check_branch
      %19 = sbr.rel (0) target = $region9
    $region8: #{tpu_custom_call.1} parent=1 // pred_region
      %20 = dma.done [#allocation3], 256
    $region9: #{tpu_custom_call.1} parent=1 // pred_fallthru
      _
    %v21 = vld [vmem:[#allocation2] sm:$0xff]
    %v22 = vld [vmem:[#allocation2 + $0x8] sm:$0xff]
    %v23 = vmul.f32 %v21, 64.0
    %v24 = vmul.f32 %v22, 64.0
    %v25 = vcvt.f32.s32.to.zero.pseudo %v23
    %v26 = vcvt.f32.s32.to.zero.pseudo %v24
    %v27 = vshll.u32 %v25, 16
    %v28 = vshll.u32 %v26, 16
    %v29 = vshra.s32 %v27, 16
    %v30 = vshra.s32 %v28, 16
    %v31 = vcvt.s32.f32 %v29
    %v32 = vcvt.s32.f32 %v30
    %v33 = vmul.f32 %v31, 0.015625
    %v34 = vmul.f32 %v32, 0.015625
    %35 = vst [vmem:[#allocation5] sm:$0xff] %v33
    %36 = vst [vmem:[#allocation5 + $0x8] sm:$0xff] %v34
    // Predicated region
    $region10: #{tpu_custom_call.1} parent=1 // pred_check
      _
    $region11: #{tpu_custom_call.1} parent=1 // pred_check_branch
      %38 = sbr.rel (0) target = $region13
    $region12: #{tpu_custom_call.1} parent=1 // pred_region
      %s40 = ssub.s32 256, 256
      %41 = vsyncadd [#allocation4], %s40
      %s43 = sshll.u32 [#allocation5], 4
      %s44 = int_to_ptr.vmem [resolvable:$true] %s43
      %46 = dma.vmem_to_hbm [thread:$0]  %s44, 256, %s1, [#allocation4]
    $region13: #{tpu_custom_call.1} parent=1 // pred_fallthru
      _
    // Predicated region
    $region14: #{tpu_custom_call.1} parent=1 // pred_check
      _
    $region15: #{tpu_custom_call.1} parent=1 // pred_check_branch
      %48 = sbr.rel (0) target = $region17
    $region16: #{tpu_custom_call.1} parent=1 // pred_region
      %49 = dma.done [#allocation4], 256
    $region17: #{tpu_custom_call.1} parent=1 // pred_fallthru
      _
    %50 = vsyncpa [#allocation3], 1
    %51 = vsyncpa [#allocation4], 1

</llo_original>
